<compile_context>
chip_gen: v7x
topology: tpu7x:2x2x1
jax: 0.10.0
libtpu: 0.0.40
codegen_flags: <defaults>
</compile_context>

<pallas_src>
import functools

import jax
import jax.numpy as jnp
from jax.experimental import pallas as pl
from jax.experimental.pallas import tpu as pltpu


def _round_up(x, m):
    return ((x + m - 1) // m) * m


def _num_parallel_cores():
    """2 on v7x (two TensorCores share the 'parallel' grid axis), else 1."""
    try:
        kind = jax.devices()[0].device_kind.lower()
    except Exception:
        return 1
    return 2 if "v7" in kind else 1


def _choose_batch_tile(batch, cap, n_cores):
    """Batch tile (lane dim) as a multiple of 128; maximal on single-TC chips,
    split >=2 ways on v7x when the batch is big enough to benefit."""
    lane = 128
    cap = max(lane, _round_up(cap, lane))
    full = _round_up(max(batch, 1), lane)
    if n_cores > 1:
        per_core = _round_up(pl.cdiv(batch, n_cores), lane)
        return min(per_core, cap)
    return min(full, cap)


def _dddqn_kernel(x_ref, w1_ref, b1_ref, w2_ref, b2_ref, w3_ref, b3_ref, out_ref):
    # Feature-major: x is (D, TB); batch lives on the 128-lane axis throughout.
    x = x_ref[...]                                                      # (D, TB) bf16

    h = jnp.dot(w1_ref[...], x, preferred_element_type=jnp.float32) + b1_ref[...]
    h = jnp.maximum(h, 0.0).astype(jnp.bfloat16)                        # (2*H1, TB)

    h = jnp.dot(w2_ref[...], h, preferred_element_type=jnp.float32) + b2_ref[...]
    h = jnp.maximum(h, 0.0).astype(jnp.bfloat16)                        # (2*H2, TB)

    out = jnp.dot(w3_ref[...], h, preferred_element_type=jnp.float32) + b3_ref[...]
    # Rows [0, A): v + a_j.  Row A: Sigma_j a_j.  Rows A+1..R-1: zero padding.
    out_ref[...] = out                                                  # (R, TB) f32, lane-dense store


def fuse_params(p):
    """Fuse the 6 Linear layers into 3 feature-major (bf16) matmuls + f32 biases."""
    H1 = p["wv1"].shape[1]
    H2 = p["wv2"].shape[1]
    A = p["wa3"].shape[1]
    R = _round_up(A + 1, 8)   # output rows: A q-rows + 1 Sigma_a row, padded to sublane multiple

    # Layer 1: rows [0, H1) = value stream, rows [H1, 2*H1) = advantage stream.
    w1 = jnp.concatenate([p["wv1"].T, p["wa1"].T], axis=0)              # (2*H1, D)
    b1 = jnp.concatenate([p["bv1"].T, p["ba1"].T], axis=0)              # (2*H1, 1)

    # Layer 2: block-diagonal (the two streams stay independent).
    w2 = jnp.zeros((2 * H2, 2 * H1), jnp.float32)
    w2 = w2.at[:H2, :H1].set(p["wv2"].T).at[H2:, H1:].set(p["wa2"].T)   # (2*H2, 2*H1)
    b2 = jnp.concatenate([p["bv2"].T, p["ba2"].T], axis=0)              # (2*H2, 1)

    # Layer 3: row j < A  -> v + a_j
    #          row A      -> Sigma_j a_j      (the MXU does the advantage reduce)
    #          rows A+1.. -> 0
    w3 = jnp.zeros((R, 2 * H2), jnp.float32)
    w3 = w3.at[:A, :H2].set(jnp.broadcast_to(p["wv3"].T, (A, H2)))      # v into every q row
    w3 = w3.at[:A, H2:].set(p["wa3"].T)                                 # a_j into q row j
    w3 = w3.at[A, H2:].set(jnp.sum(p["wa3"], axis=1))                   # Sigma_j a_j row
    b3 = jnp.zeros((R, 1), jnp.float32)
    b3 = b3.at[:A, :].set(p["bv3"][0, 0] + p["ba3"].T)
    b3 = b3.at[A, 0].set(jnp.sum(p["ba3"]))

    return (w1.astype(jnp.bfloat16), b1,
            w2.astype(jnp.bfloat16), b2,
            w3.astype(jnp.bfloat16), b3)


def dddqn_forward(state, params, *, batch_tile=4096):
    """state: (B, input_dims) float32. Returns q: (B, n_actions) float32."""
    B, D = state.shape
    A = params["wa3"].shape[1]
    w1, b1, w2, b2, w3, b3 = fuse_params(params)
    R = w3.shape[0]

    n_cores = _num_parallel_cores()
    tb = _choose_batch_tile(B, batch_tile, n_cores)
    b_pad = _round_up(B, tb)
    nt = b_pad // tb

    # Feature-major input: (D, b_pad) bf16 (tiny wrapper-side layout plumbing).
    x = state.astype(jnp.bfloat16).T
    if b_pad != B:
        x = jnp.pad(x, ((0, 0), (0, b_pad - B)))

    def pinned(arr):
        # Weights/biases: full-array block, constant index_map -> stays VMEM-resident.
        return pl.BlockSpec(arr.shape, lambda i: (0, 0))

    out = pl.pallas_call(
        _dddqn_kernel,
        out_shape=jax.ShapeDtypeStruct((R, b_pad), jnp.float32),
        grid=(nt,),
        in_specs=[
            pl.BlockSpec((D, tb), lambda i: (0, i)),
            pinned(w1), pinned(b1),
            pinned(w2), pinned(b2),
            pinned(w3), pinned(b3),
        ],
        out_specs=pl.BlockSpec((R, tb), lambda i: (0, i)),
        compiler_params=pltpu.CompilerParams(
            dimension_semantics=("parallel",),
            vmem_limit_bytes=32 * 1024 * 1024),
    )(x, w1, b1, w2, b2, w3, b3)

    # Finish the global advantage mean over the valid batch rows (tiny scalar work),
    # then q = v + (a - a.mean()).  Padded columns are excluded by the [:B] slices.
    a_mean = jnp.sum(out[A, :B]) / jnp.float32(B * A)
    return out[:A, :B].T - a_mean


def init_params(key, input_dims, l1_dims, l2_dims, n_actions):
    """Deterministic PyTorch-style uniform +-1/sqrt(fan_in) init.
    Weights stored as (in, out); biases as (1, out)."""
    def linear(k, fan_in, fan_out):
        kw, kb = jax.random.split(k)
        bound = 1.0 / jnp.sqrt(jnp.float32(fan_in))
        w = jax.random.uniform(kw, (fan_in, fan_out), jnp.float32, -bound, bound)
        b = jax.random.uniform(kb, (1, fan_out), jnp.float32, -bound, bound)
        return w, b

    keys = jax.random.split(key, 6)
    wa1, ba1 = linear(keys[0], input_dims, l1_dims)
    wa2, ba2 = linear(keys[1], l1_dims, l2_dims)
    wa3, ba3 = linear(keys[2], l2_dims, n_actions)
    wv1, bv1 = linear(keys[3], input_dims, l1_dims)
    wv2, bv2 = linear(keys[4], l1_dims, l2_dims)
    wv3, bv3 = linear(keys[5], l2_dims, 1)
    return dict(wa1=wa1, ba1=ba1, wa2=wa2, ba2=ba2, wa3=wa3, ba3=ba3,
                wv1=wv1, bv1=bv1, wv2=wv2, bv2=bv2, wv3=wv3, bv3=bv3)


def dddqn_reference(state, p):
    """Pure-JAX reference of the PyTorch forward, with the same bf16 matmul
    inputs / f32 accumulation as the kernel (so the comparison is tight)."""
    def mm(x, w):
        return jnp.dot(x.astype(jnp.bfloat16), w.astype(jnp.bfloat16),
                       preferred_element_type=jnp.float32)
    v = jax.nn.relu(mm(state, p["wv1"]) + p["bv1"])
    v = jax.nn.relu(mm(v, p["wv2"]) + p["bv2"])
    v = mm(v, p["wv3"]) + p["bv3"]
    a = jax.nn.relu(mm(state, p["wa1"]) + p["ba1"])
    a = jax.nn.relu(mm(a, p["wa2"]) + p["ba2"])
    a = mm(a, p["wa3"]) + p["ba3"]
    return v + (a - jnp.mean(a))


if __name__ == "__main__":
    key = jax.random.PRNGKey(0)
    k_params, k_state1, k_state2 = jax.random.split(key, 3)

    input_dims, l1_dims, l2_dims, n_actions = 8, 32, 32, 4
    params = init_params(k_params, input_dims, l1_dims, l2_dims, n_actions)

    # Case 1: tiny batch -> single maximal tile.
    state_small = jax.random.normal(k_state1, (4, input_dims), jnp.float32)
    q_small = jax.block_until_ready(dddqn_forward(state_small, params))
    q_small_ref = dddqn_reference(state_small, params)
    assert q_small.shape == (4, n_actions)
    assert jnp.allclose(q_small, q_small_ref, atol=2e-3, rtol=2e-3), "small-batch mismatch"

    # Case 2: multi-tile batch with padding (exercises gridding + the wrapper-side
    # global-mean finish over only the valid rows).
    state_big = jax.random.normal(k_state2, (300, input_dims), jnp.float32)
    q_big = jax.block_until_ready(dddqn_forward(state_big, params, batch_tile=128))
    q_big_ref = dddqn_reference(state_big, params)
    assert q_big.shape == (300, n_actions)
    assert jnp.allclose(q_big, q_big_ref, atol=2e-3, rtol=2e-3), "multi-tile mismatch"

    print("KERNEL_OK")
</pallas_src>

<mosaic_0001>
module attributes {stable_mosaic.version = 11 : i64} {
  func.func @_dddqn_kernel(%arg0: i32, %arg1: memref<8x128xbf16, #tpu.memory_space<vmem>>, %arg2: memref<64x8xbf16, #tpu.memory_space<vmem>>, %arg3: memref<64x1xf32, #tpu.memory_space<vmem>>, %arg4: memref<64x64xbf16, #tpu.memory_space<vmem>>, %arg5: memref<64x1xf32, #tpu.memory_space<vmem>>, %arg6: memref<8x64xbf16, #tpu.memory_space<vmem>>, %arg7: memref<8x1xf32, #tpu.memory_space<vmem>>, %arg8: memref<8x128xf32, #tpu.memory_space<vmem>>) attributes {dimension_semantics = [#tpu.dimension_semantics<parallel>], iteration_bounds = array<i64: 1>, scalar_prefetch = 0 : i64, scratch_operands = 0 : i64, tpu.core_type = #tpu.core_type<tc>, window_params = [{transform_indices = @transform_0, window_bounds = array<i64: 8, 128>}, {pipeline_mode = #tpu.pipeline_mode<synchronous>, transform_indices = @transform_1, window_bounds = array<i64: 64, 8>}, {pipeline_mode = #tpu.pipeline_mode<synchronous>, transform_indices = @transform_2, window_bounds = array<i64: 64, 1>}, {pipeline_mode = #tpu.pipeline_mode<synchronous>, transform_indices = @transform_3, window_bounds = array<i64: 64, 64>}, {pipeline_mode = #tpu.pipeline_mode<synchronous>, transform_indices = @transform_4, window_bounds = array<i64: 64, 1>}, {pipeline_mode = #tpu.pipeline_mode<synchronous>, transform_indices = @transform_5, window_bounds = array<i64: 8, 64>}, {pipeline_mode = #tpu.pipeline_mode<synchronous>, transform_indices = @transform_6, window_bounds = array<i64: 8, 1>}, {transform_indices = @transform_7, window_bounds = array<i64: 8, 128>}]} {
    %c0 = arith.constant 0 : index
    %c0_0 = arith.constant 0 : index
    %0 = vector.load %arg1[%c0, %c0_0] : memref<8x128xbf16, #tpu.memory_space<vmem>>, vector<8x128xbf16>
    %c0_1 = arith.constant 0 : index
    %c0_2 = arith.constant 0 : index
    %1 = vector.load %arg2[%c0_1, %c0_2] : memref<64x8xbf16, #tpu.memory_space<vmem>>, vector<64x8xbf16>
    %cst = arith.constant dense<0.000000e+00> : vector<64x128xf32>
    %2 = tpu.matmul %1, %0, %cst {dimension_numbers = #tpu.dot_dimension_numbers<[1], [0], [0], [1], [0, 0, 1, 1], [], []>} : vector<64x8xbf16>, vector<8x128xbf16>, vector<64x128xf32> -> vector<64x128xf32>
    %c0_3 = arith.constant 0 : index
    %c0_4 = arith.constant 0 : index
    %3 = vector.load %arg3[%c0_3, %c0_4] : memref<64x1xf32, #tpu.memory_space<vmem>>, vector<64x1xf32>
    %4 = vector.broadcast %3 : vector<64x1xf32> to vector<64x128xf32>
    %5 = arith.addf %2, %4 : vector<64x128xf32>
    %cst_5 = arith.constant 0.000000e+00 : f32
    %6 = vector.broadcast %cst_5 : f32 to vector<64x128xf32>
    %7 = arith.maximumf %5, %6 : vector<64x128xf32>
    %8 = arith.truncf %7 : vector<64x128xf32> to vector<64x128xbf16>
    %c0_6 = arith.constant 0 : index
    %c0_7 = arith.constant 0 : index
    %9 = vector.load %arg4[%c0_6, %c0_7] : memref<64x64xbf16, #tpu.memory_space<vmem>>, vector<64x64xbf16>
    %cst_8 = arith.constant dense<0.000000e+00> : vector<64x128xf32>
    %10 = tpu.matmul %9, %8, %cst_8 {dimension_numbers = #tpu.dot_dimension_numbers<[1], [0], [0], [1], [0, 0, 1, 1], [], []>} : vector<64x64xbf16>, vector<64x128xbf16>, vector<64x128xf32> -> vector<64x128xf32>
    %c0_9 = arith.constant 0 : index
    %c0_10 = arith.constant 0 : index
    %11 = vector.load %arg5[%c0_9, %c0_10] : memref<64x1xf32, #tpu.memory_space<vmem>>, vector<64x1xf32>
    %12 = vector.broadcast %11 : vector<64x1xf32> to vector<64x128xf32>
    %13 = arith.addf %10, %12 : vector<64x128xf32>
    %cst_11 = arith.constant 0.000000e+00 : f32
    %14 = vector.broadcast %cst_11 : f32 to vector<64x128xf32>
    %15 = arith.maximumf %13, %14 : vector<64x128xf32>
    %16 = arith.truncf %15 : vector<64x128xf32> to vector<64x128xbf16>
    %c0_12 = arith.constant 0 : index
    %c0_13 = arith.constant 0 : index
    %17 = vector.load %arg6[%c0_12, %c0_13] : memref<8x64xbf16, #tpu.memory_space<vmem>>, vector<8x64xbf16>
    %cst_14 = arith.constant dense<0.000000e+00> : vector<8x128xf32>
    %18 = tpu.matmul %17, %16, %cst_14 {dimension_numbers = #tpu.dot_dimension_numbers<[1], [0], [0], [1], [0, 0, 1, 1], [], []>} : vector<8x64xbf16>, vector<64x128xbf16>, vector<8x128xf32> -> vector<8x128xf32>
    %c0_15 = arith.constant 0 : index
    %c0_16 = arith.constant 0 : index
    %19 = vector.load %arg7[%c0_15, %c0_16] : memref<8x1xf32, #tpu.memory_space<vmem>>, vector<8x1xf32>
    %20 = vector.broadcast %19 : vector<8x1xf32> to vector<8x128xf32>
    %21 = arith.addf %18, %20 : vector<8x128xf32>
    %c0_17 = arith.constant 0 : index
    %c0_18 = arith.constant 0 : index
    %22 = vector.load %arg8[%c0_17, %c0_18] : memref<8x128xf32, #tpu.memory_space<vmem>>, vector<8x128xf32>
    tpu.vector_store %arg8[%c0_17, %c0_18], %21 {strides = array<i32>} : memref<8x128xf32, #tpu.memory_space<vmem>>, vector<8x128xf32>,
    return
  }
  func.func @transform_0(%arg0: i32) -> (i32, i32) {
    %c0_i32 = arith.constant 0 : i32
    %c0_i32_0 = arith.constant 0 : i32
    return %c0_i32, %arg0 : i32, i32
  }
  func.func @transform_1(%arg0: i32) -> (i32, i32) {
    %c0_i32 = arith.constant 0 : i32
    %c0_i32_0 = arith.constant 0 : i32
    %c0_i32_1 = arith.constant 0 : i32
    return %c0_i32, %c0_i32_0 : i32, i32
  }
  func.func @transform_2(%arg0: i32) -> (i32, i32) {
    %c0_i32 = arith.constant 0 : i32
    %c0_i32_0 = arith.constant 0 : i32
    %c0_i32_1 = arith.constant 0 : i32
    return %c0_i32, %c0_i32_0 : i32, i32
  }
  func.func @transform_3(%arg0: i32) -> (i32, i32) {
    %c0_i32 = arith.constant 0 : i32
    %c0_i32_0 = arith.constant 0 : i32
    %c0_i32_1 = arith.constant 0 : i32
    return %c0_i32, %c0_i32_0 : i32, i32
  }
  func.func @transform_4(%arg0: i32) -> (i32, i32) {
    %c0_i32 = arith.constant 0 : i32
    %c0_i32_0 = arith.constant 0 : i32
    %c0_i32_1 = arith.constant 0 : i32
    return %c0_i32, %c0_i32_0 : i32, i32
  }
  func.func @transform_5(%arg0: i32) -> (i32, i32) {
    %c0_i32 = arith.constant 0 : i32
    %c0_i32_0 = arith.constant 0 : i32
    %c0_i32_1 = arith.constant 0 : i32
    return %c0_i32, %c0_i32_0 : i32, i32
  }
  func.func @transform_6(%arg0: i32) -> (i32, i32) {
    %c0_i32 = arith.constant 0 : i32
    %c0_i32_0 = arith.constant 0 : i32
    %c0_i32_1 = arith.constant 0 : i32
    return %c0_i32, %c0_i32_0 : i32, i32
  }
  func.func @transform_7(%arg0: i32) -> (i32, i32) {
    %c0_i32 = arith.constant 0 : i32
    %c0_i32_0 = arith.constant 0 : i32
    return %c0_i32, %arg0 : i32, i32
  }
}

</mosaic_0001>

<llo_original>
// kernel: tpu_custom_call.1
$region0: #{tpu_custom_call.1}
  #allocation0 [shape = 'u32[]', space=smem, size = 0x4, offset = 0x4, fixed_abs, tag = 'smem constant byte address 0x4 - core index']
  #allocation1 [shape = 'u32[144,128]{1,0:T(1,128)}', space=vmem, size = 0x12000, scoped, tag = 'internal scratch']
  %s0 = inlined_call_operand.vmem [shape: bf16[8,128], index: 0, kind: input, shape index: {}]
  %s1 = inlined_call_operand.vmem [shape: bf16[64,8], index: 1, kind: input, shape index: {}]
  %s2 = inlined_call_operand.vmem [shape: f32[64,1], index: 2, kind: input, shape index: {}]
  %s3 = inlined_call_operand.vmem [shape: bf16[64,64], index: 3, kind: input, shape index: {}]
  %s4 = inlined_call_operand.vmem [shape: f32[64,1], index: 4, kind: input, shape index: {}]
  %s5 = inlined_call_operand.vmem [shape: bf16[8,64], index: 5, kind: input, shape index: {}]
  %s6 = inlined_call_operand.vmem [shape: f32[8,1], index: 6, kind: input, shape index: {}]
  %s7 = inlined_call_operand.hbm [shape: f32[8,128], index: 7, kind: output, shape index: {}]
  %s8 = sld [smem:[#allocation0]]
  $region38: #{tpu_custom_call.1} parent=0
    _
  %s10 = ssub.s32 1, %s8
  %s11 = scalar_select 0, %s10, %s8
  $region1: #{tpu_custom_call.1} parent=0
    #allocation2 [shape = 'u8[4096]{0}', space=vmem, size = 0x1000, scoped, tag = 'output window, operand 0, single buffered']
    #allocation3 [shape = 's32[1]{0}', space=sflag, size = 0x4, scoped, tag = 'scoped memory for tpu_custom_call.1']
    %12 = vsyncpa [#allocation3], 0
    // Predicated region
    $region2: #{tpu_custom_call.1} parent=1 // pred_check
      _
    $region3: #{tpu_custom_call.1} parent=1 // pred_check_branch
      %14 = sbr.rel (0) target = $region5
    $region4: #{tpu_custom_call.1} parent=1 // pred_region
      _
    $region5: #{tpu_custom_call.1} parent=1 // pred_fallthru
      _
    // Predicated region
    $region6: #{tpu_custom_call.1} parent=1 // pred_check
      _
    $region7: #{tpu_custom_call.1} parent=1 // pred_check_branch
      %16 = sbr.rel (0) target = $region9
    $region8: #{tpu_custom_call.1} parent=1 // pred_region
      _
    $region9: #{tpu_custom_call.1} parent=1 // pred_fallthru
      _
    // Predicated region
    $region10: #{tpu_custom_call.1} parent=1 // pred_check
      _
    $region11: #{tpu_custom_call.1} parent=1 // pred_check_branch
      %18 = sbr.rel (0) target = $region13
    $region12: #{tpu_custom_call.1} parent=1 // pred_region
      _
    $region13: #{tpu_custom_call.1} parent=1 // pred_fallthru
      _
    // Predicated region
    $region14: #{tpu_custom_call.1} parent=1 // pred_check
      _
    $region15: #{tpu_custom_call.1} parent=1 // pred_check_branch
      %20 = sbr.rel (0) target = $region17
    $region16: #{tpu_custom_call.1} parent=1 // pred_region
      _
    $region17: #{tpu_custom_call.1} parent=1 // pred_fallthru
      _
    // Predicated region
    $region18: #{tpu_custom_call.1} parent=1 // pred_check
      _
    $region19: #{tpu_custom_call.1} parent=1 // pred_check_branch
      %22 = sbr.rel (0) target = $region21
    $region20: #{tpu_custom_call.1} parent=1 // pred_region
      _
    $region21: #{tpu_custom_call.1} parent=1 // pred_fallthru
      _
    // Predicated region
    $region22: #{tpu_custom_call.1} parent=1 // pred_check
      _
    $region23: #{tpu_custom_call.1} parent=1 // pred_check_branch
      %24 = sbr.rel (0) target = $region25
    $region24: #{tpu_custom_call.1} parent=1 // pred_region
      _
    $region25: #{tpu_custom_call.1} parent=1 // pred_fallthru
      _
    // Predicated region
    $region26: #{tpu_custom_call.1} parent=1 // pred_check
      _
    $region27: #{tpu_custom_call.1} parent=1 // pred_check_branch
      %26 = sbr.rel (0) target = $region29
    $region28: #{tpu_custom_call.1} parent=1 // pred_region
      _
    $region29: #{tpu_custom_call.1} parent=1 // pred_fallthru
      _
    %v28 = vld [vmem:[%s0] sm:$0xf]
    %v29 = vld [vmem:[%s1] sm:$0xf]
    %v30 = vld [vmem:[%s1 + $0x4] sm:$0xf]
    %v31 = vld [vmem:[%s1 + $0x8] sm:$0xf]
    %v32 = vld [vmem:[%s1 + $0xc] sm:$0xf]
    %v33 = vld [vmem:[%s1 + $0x10] sm:$0xf]
    %v34 = vld [vmem:[%s1 + $0x14] sm:$0xf]
    %v35 = vld [vmem:[%s1 + $0x18] sm:$0xf]
    %v36 = vld [vmem:[%s1 + $0x1c] sm:$0xf]
    %v37 = vld [vmem:[%s2] sm:$0xff]
    %v38 = vld [vmem:[%s2 + $0x8] sm:$0xff]
    %v39 = vld [vmem:[%s2 + $0x10] sm:$0xff]
    %v40 = vld [vmem:[%s2 + $0x18] sm:$0xff]
    %v41 = vld [vmem:[%s2 + $0x20] sm:$0xff]
    %v42 = vld [vmem:[%s2 + $0x28] sm:$0xff]
    %v43 = vld [vmem:[%s2 + $0x30] sm:$0xff]
    %v44 = vld [vmem:[%s2 + $0x38] sm:$0xff]
    %46 = vset.pattern.permute.xlu0 0
    %47 = vperm.xlu0 %46, %v37
    %v48 = vpop.permute.xlu0 %47
    %51 = vset.pattern.permute.xlu0 0
    %52 = vperm.xlu0 %51, %v38
    %v53 = vpop.permute.xlu0 %52
    %56 = vset.pattern.permute.xlu0 0
    %57 = vperm.xlu0 %56, %v39
    %v58 = vpop.permute.xlu0 %57
    %61 = vset.pattern.permute.xlu0 0
    %62 = vperm.xlu0 %61, %v40
    %v63 = vpop.permute.xlu0 %62
    %66 = vset.pattern.permute.xlu0 0
    %67 = vperm.xlu0 %66, %v41
    %v68 = vpop.permute.xlu0 %67
    %71 = vset.pattern.permute.xlu0 0
    %72 = vperm.xlu0 %71, %v42
    %v73 = vpop.permute.xlu0 %72
    %76 = vset.pattern.permute.xlu0 0
    %77 = vperm.xlu0 %76, %v43
    %v78 = vpop.permute.xlu0 %77
    %81 = vset.pattern.permute.xlu0 0
    %82 = vperm.xlu0 %81, %v44
    %v83 = vpop.permute.xlu0 %82
    %v93 = vunpack.c.l.b16 %v29
    %v94 = vunpack.c.l.b16 %v30
    %v95 = vunpack.c.l.b16 %v31
    %v96 = vunpack.c.l.b16 %v32
    %v97 = vunpack.c.l.b16 %v33
    %v98 = vunpack.c.l.b16 %v34
    %v99 = vunpack.c.l.b16 %v35
    %v100 = vunpack.c.l.b16 %v36
    %v101 = vpack.c.b16 %v94, %v93
    %v102 = vpack.c.b16 %v96, %v95
    %v103 = vpack.c.b16 %v98, %v97
    %v104 = vpack.c.b16 %v100, %v99
    %vm105 = vcmask 64512
    %v107 = vsel %vm105, %v101, 0
    %v110 = vsel %vm105, %v102, 0
    %v113 = vsel %vm105, %v103, 0
    %v116 = vsel %vm105, %v104, 0
    %vm118 = vcmask 1043456
    %v120 = vsel %vm118, %v28, 0
    %122 = vmatprep.subr.bf16.mxu0 0
    %123 = vmatpush1.bf16.msra.mxu0 %v120
    %124 = vmatprep.subr.bf16.mxu0 0
    %125 = vmatpush1.bf16.msra.mxu0 0
    %126 = vmatprep.subr.bf16.mxu0 0
    %127 = vmatpush1.bf16.msra.mxu0 0
    %128 = vmatprep.subr.bf16.mxu0 0
    %129 = vmatpush1.bf16.msra.mxu0 0
    %130 = vmatprep.subr.bf16.mxu0 0
    %131 = vmatpush1.bf16.msra.mxu0 0
    %132 = vmatprep.subr.bf16.mxu0 0
    %133 = vmatpush1.bf16.msra.mxu0 0
    %134 = vmatprep.subr.bf16.mxu0 0
    %135 = vmatpush1.bf16.msra.mxu0 0
    %136 = vmatprep.subr.bf16.mxu0 0
    %137 = vmatpush1.bf16.msra.mxu0 0
    %138 = vmatprep.subr.bf16.mxu0 0
    %139 = vmatpush1.bf16.msra.mxu0 0
    %140 = vmatprep.subr.bf16.mxu0 0
    %141 = vmatpush1.bf16.msra.mxu0 0
    %142 = vmatprep.subr.bf16.mxu0 0
    %143 = vmatpush1.bf16.msra.mxu0 0
    %144 = vmatprep.subr.bf16.mxu0 0
    %145 = vmatpush1.bf16.msra.mxu0 0
    %146 = vmatprep.subr.bf16.mxu0 0
    %147 = vmatpush1.bf16.msra.mxu0 0
    %148 = vmatprep.subr.bf16.mxu0 0
    %149 = vmatpush1.bf16.msra.mxu0 0
    %150 = vmatprep.subr.bf16.mxu0 0
    %151 = vmatpush1.bf16.msra.mxu0 0
    %152 = vmatprep.subr.bf16.mxu0 0
    %153 = vmatpush1.bf16.msra.mxu0 0
    %154 = vmatprep.mubr.bf16.mxu0 0
    %155 = vmatmul.mubr.bf16.gmra.mrb[0].mxu0 %v107
    %v156 = vpop.f32.mrb[0].mxu0
    %v157 = vadd.f32 %v48, %v156
    %v158 = vpop.f32.mrb[0].mxu0
    %v159 = vpop.f32.mrb[0].mxu0
    %v160 = vadd.f32 %v53, %v159
    %v161 = vpop.f32.mrb[0].mxu0
    %162 = vmatprep.mubr.bf16.mxu0 0
    %163 = vmatmul.mubr.bf16.gmra.mrb[0].mxu0 %v110
    %v164 = vpop.f32.mrb[0].mxu0
    %v165 = vadd.f32 %v58, %v164
    %v166 = vpop.f32.mrb[0].mxu0
    %v167 = vpop.f32.mrb[0].mxu0
    %v168 = vadd.f32 %v63, %v167
    %v169 = vpop.f32.mrb[0].mxu0
    %170 = vmatprep.mubr.bf16.mxu0 0
    %171 = vmatmul.mubr.bf16.gmra.mrb[0].mxu0 %v113
    %v172 = vpop.f32.mrb[0].mxu0
    %v173 = vadd.f32 %v68, %v172
    %v174 = vpop.f32.mrb[0].mxu0
    %v175 = vpop.f32.mrb[0].mxu0
    %v176 = vadd.f32 %v73, %v175
    %v177 = vpop.f32.mrb[0].mxu0
    %178 = vmatprep.mubr.bf16.mxu0 0
    %179 = vmatmul.mubr.bf16.gmra.mrb[0].mxu0 %v116
    %v180 = vpop.f32.mrb[0].mxu0
    %v181 = vadd.f32 %v78, %v180
    %v182 = vpop.f32.mrb[0].mxu0
    %v183 = vpop.f32.mrb[0].mxu0
    %v184 = vadd.f32 %v83, %v183
    %v185 = vpop.f32.mrb[0].mxu0
    %186 = vdwg.mxu0
    %v187 = vmax.f32 %v157, 0.0
    %v188 = vmax.f32 %v160, 0.0
    %v189 = vmax.f32 %v165, 0.0
    %v190 = vmax.f32 %v168, 0.0
    %v191 = vmax.f32 %v173, 0.0
    %v192 = vmax.f32 %v176, 0.0
    %v193 = vmax.f32 %v181, 0.0
    %v194 = vmax.f32 %v184, 0.0
    %v195 = vpack.c.bf16 %v188, %v187
    %v196 = vpack.c.bf16 %v190, %v189
    %v197 = vpack.c.bf16 %v192, %v191
    %v198 = vpack.c.bf16 %v194, %v193
    %v199 = vld [vmem:[%s3] sm:$0xf]
    %v200 = vld [vmem:[%s3 + $0x4] sm:$0xf]
    %v201 = vld [vmem:[%s3 + $0x8] sm:$0xf]
    %v202 = vld [vmem:[%s3 + $0xc] sm:$0xf]
    %v203 = vld [vmem:[%s3 + $0x10] sm:$0xf]
    %v204 = vld [vmem:[%s3 + $0x14] sm:$0xf]
    %v205 = vld [vmem:[%s3 + $0x18] sm:$0xf]
    %v206 = vld [vmem:[%s3 + $0x1c] sm:$0xf]
    %v207 = vld [vmem:[%s4] sm:$0xff]
    %v208 = vld [vmem:[%s4 + $0x8] sm:$0xff]
    %v209 = vld [vmem:[%s4 + $0x10] sm:$0xff]
    %v210 = vld [vmem:[%s4 + $0x18] sm:$0xff]
    %v211 = vld [vmem:[%s4 + $0x20] sm:$0xff]
    %v212 = vld [vmem:[%s4 + $0x28] sm:$0xff]
    %v213 = vld [vmem:[%s4 + $0x30] sm:$0xff]
    %v214 = vld [vmem:[%s4 + $0x38] sm:$0xff]
    %216 = vset.pattern.permute.xlu0 0
    %217 = vperm.xlu0 %216, %v207
    %v218 = vpop.permute.xlu0 %217
    %221 = vset.pattern.permute.xlu0 0
    %222 = vperm.xlu0 %221, %v208
    %v223 = vpop.permute.xlu0 %222
    %226 = vset.pattern.permute.xlu0 0
    %227 = vperm.xlu0 %226, %v209
    %v228 = vpop.permute.xlu0 %227
    %231 = vset.pattern.permute.xlu0 0
    %232 = vperm.xlu0 %231, %v210
    %v233 = vpop.permute.xlu0 %232
    %236 = vset.pattern.permute.xlu0 0
    %237 = vperm.xlu0 %236, %v211
    %v238 = vpop.permute.xlu0 %237
    %241 = vset.pattern.permute.xlu0 0
    %242 = vperm.xlu0 %241, %v212
    %v243 = vpop.permute.xlu0 %242
    %246 = vset.pattern.permute.xlu0 0
    %247 = vperm.xlu0 %246, %v213
    %v248 = vpop.permute.xlu0 %247
    %251 = vset.pattern.permute.xlu0 0
    %252 = vperm.xlu0 %251, %v214
    %v253 = vpop.permute.xlu0 %252
    %v263 = vunpack.c.l.b16 %v199
    %v264 = vunpack.c.l.b16 %v200
    %v265 = vunpack.c.l.b16 %v201
    %v266 = vunpack.c.l.b16 %v202
    %v267 = vunpack.c.l.b16 %v203
    %v268 = vunpack.c.l.b16 %v204
    %v269 = vunpack.c.l.b16 %v205
    %v270 = vunpack.c.l.b16 %v206
    %v271 = vpack.c.b16 %v264, %v263
    %v272 = vpack.c.b16 %v266, %v265
    %v273 = vpack.c.b16 %v268, %v267
    %v274 = vpack.c.b16 %v270, %v269
    %vm275 = vcmask 523264
    %v277 = vsel %vm275, %v271, 0
    %v280 = vsel %vm275, %v272, 0
    %v283 = vsel %vm275, %v273, 0
    %v286 = vsel %vm275, %v274, 0
    %288 = vmatprep.subr.bf16.mxu0 0
    %289 = vmatpush1.bf16.msra.mxu0 %v195
    %290 = vmatprep.subr.bf16.mxu0 0
    %291 = vmatpush1.bf16.msra.mxu0 %v196
    %292 = vmatprep.subr.bf16.mxu0 0
    %293 = vmatpush1.bf16.msra.mxu0 %v197
    %294 = vmatprep.subr.bf16.mxu0 0
    %295 = vmatpush1.bf16.msra.mxu0 %v198
    %296 = vmatprep.subr.bf16.mxu0 0
    %297 = vmatpush1.bf16.msra.mxu0 0
    %298 = vmatprep.subr.bf16.mxu0 0
    %299 = vmatpush1.bf16.msra.mxu0 0
    %300 = vmatprep.subr.bf16.mxu0 0
    %301 = vmatpush1.bf16.msra.mxu0 0
    %302 = vmatprep.subr.bf16.mxu0 0
    %303 = vmatpush1.bf16.msra.mxu0 0
    %304 = vmatprep.subr.bf16.mxu0 0
    %305 = vmatpush1.bf16.msra.mxu0 0
    %306 = vmatprep.subr.bf16.mxu0 0
    %307 = vmatpush1.bf16.msra.mxu0 0
    %308 = vmatprep.subr.bf16.mxu0 0
    %309 = vmatpush1.bf16.msra.mxu0 0
    %310 = vmatprep.subr.bf16.mxu0 0
    %311 = vmatpush1.bf16.msra.mxu0 0
    %312 = vmatprep.subr.bf16.mxu0 0
    %313 = vmatpush1.bf16.msra.mxu0 0
    %314 = vmatprep.subr.bf16.mxu0 0
    %315 = vmatpush1.bf16.msra.mxu0 0
    %316 = vmatprep.subr.bf16.mxu0 0
    %317 = vmatpush1.bf16.msra.mxu0 0
    %318 = vmatprep.subr.bf16.mxu0 0
    %319 = vmatpush1.bf16.msra.mxu0 0
    %320 = vmatprep.mubr.bf16.mxu0 0
    %321 = vmatmul.mubr.bf16.gmra.mrb[0].mxu0 %v277
    %v322 = vpop.f32.mrb[0].mxu0
    %v323 = vadd.f32 %v218, %v322
    %v324 = vpop.f32.mrb[0].mxu0
    %v325 = vpop.f32.mrb[0].mxu0
    %v326 = vadd.f32 %v223, %v325
    %v327 = vpop.f32.mrb[0].mxu0
    %328 = vmatprep.mubr.bf16.mxu0 0
    %329 = vmatmul.mubr.bf16.gmra.mrb[0].mxu0 %v280
    %v330 = vpop.f32.mrb[0].mxu0
    %v331 = vadd.f32 %v228, %v330
    %v332 = vpop.f32.mrb[0].mxu0
    %v333 = vpop.f32.mrb[0].mxu0
    %v334 = vadd.f32 %v233, %v333
    %v335 = vpop.f32.mrb[0].mxu0
    %336 = vmatprep.mubr.bf16.mxu0 0
    %337 = vmatmul.mubr.bf16.gmra.mrb[0].mxu0 %v283
    %v338 = vpop.f32.mrb[0].mxu0
    %v339 = vadd.f32 %v238, %v338
    %v340 = vpop.f32.mrb[0].mxu0
    %v341 = vpop.f32.mrb[0].mxu0
    %v342 = vadd.f32 %v243, %v341
    %v343 = vpop.f32.mrb[0].mxu0
    %344 = vmatprep.mubr.bf16.mxu0 0
    %345 = vmatmul.mubr.bf16.gmra.mrb[0].mxu0 %v286
    %v346 = vpop.f32.mrb[0].mxu0
    %v347 = vadd.f32 %v248, %v346
    %v348 = vpop.f32.mrb[0].mxu0
    %v349 = vpop.f32.mrb[0].mxu0
    %v350 = vadd.f32 %v253, %v349
    %v351 = vpop.f32.mrb[0].mxu0
    %352 = vdwg.mxu0
    %v353 = vmax.f32 %v323, 0.0
    %v354 = vmax.f32 %v326, 0.0
    %v355 = vmax.f32 %v331, 0.0
    %v356 = vmax.f32 %v334, 0.0
    %v357 = vmax.f32 %v339, 0.0
    %v358 = vmax.f32 %v342, 0.0
    %v359 = vmax.f32 %v347, 0.0
    %v360 = vmax.f32 %v350, 0.0
    %v361 = vpack.c.bf16 %v354, %v353
    %v362 = vpack.c.bf16 %v356, %v355
    %v363 = vpack.c.bf16 %v358, %v357
    %v364 = vpack.c.bf16 %v360, %v359
    %v365 = vld [vmem:[%s5] sm:$0xf]
    %v366 = vld [vmem:[%s6] sm:$0xff]
    %368 = vset.pattern.permute.xlu0 0
    %369 = vperm.xlu0 %368, %v366
    %v370 = vpop.permute.xlu0 %369
    %v373 = vsel %vm275, %v365, 0
    %375 = vmatprep.subr.bf16.mxu0 0
    %376 = vmatpush1.bf16.msra.mxu0 %v361
    %377 = vmatprep.subr.bf16.mxu0 0
    %378 = vmatpush1.bf16.msra.mxu0 %v362
    %379 = vmatprep.subr.bf16.mxu0 0
    %380 = vmatpush1.bf16.msra.mxu0 %v363
    %381 = vmatprep.subr.bf16.mxu0 0
    %382 = vmatpush1.bf16.msra.mxu0 %v364
    %383 = vmatprep.subr.bf16.mxu0 0
    %384 = vmatpush1.bf16.msra.mxu0 0
    %385 = vmatprep.subr.bf16.mxu0 0
    %386 = vmatpush1.bf16.msra.mxu0 0
    %387 = vmatprep.subr.bf16.mxu0 0
    %388 = vmatpush1.bf16.msra.mxu0 0
    %389 = vmatprep.subr.bf16.mxu0 0
    %390 = vmatpush1.bf16.msra.mxu0 0
    %391 = vmatprep.subr.bf16.mxu0 0
    %392 = vmatpush1.bf16.msra.mxu0 0
    %393 = vmatprep.subr.bf16.mxu0 0
    %394 = vmatpush1.bf16.msra.mxu0 0
    %395 = vmatprep.subr.bf16.mxu0 0
    %396 = vmatpush1.bf16.msra.mxu0 0
    %397 = vmatprep.subr.bf16.mxu0 0
    %398 = vmatpush1.bf16.msra.mxu0 0
    %399 = vmatprep.subr.bf16.mxu0 0
    %400 = vmatpush1.bf16.msra.mxu0 0
    %401 = vmatprep.subr.bf16.mxu0 0
    %402 = vmatpush1.bf16.msra.mxu0 0
    %403 = vmatprep.subr.bf16.mxu0 0
    %404 = vmatpush1.bf16.msra.mxu0 0
    %405 = vmatprep.subr.bf16.mxu0 0
    %406 = vmatpush1.bf16.msra.mxu0 0
    %407 = vmatprep.mubr.bf16.mxu0 0
    %408 = vmatmul.mubr.bf16.gmra.mrb[0].mxu0 %v373
    %v409 = vpop.f32.mrb[0].mxu0
    %v410 = vadd.f32 %v370, %v409
    %v411 = vpop.f32.mrb[0].mxu0
    %v412 = vpop.f32.mrb[0].mxu0
    %v413 = vpop.f32.mrb[0].mxu0
    %414 = vdwg.mxu0
    %415 = vst [vmem:[#allocation2] sm:$0xff] %v410
    // Predicated region
    $region30: #{tpu_custom_call.1} parent=1 // pred_check
      _
    $region31: #{tpu_custom_call.1} parent=1 // pred_check_branch
      %417 = sbr.rel (0) target = $region33
    $region32: #{tpu_custom_call.1} parent=1 // pred_region
      %s419 = ssub.s32 128, 128
      %420 = vsyncadd [#allocation3], %s419
      %s422 = sshll.u32 [#allocation2], 4
      %s423 = int_to_ptr.vmem [resolvable:$true] %s422
      %425 = dma.vmem_to_hbm [thread:$0]  %s423, 128, %s7, [#allocation3]
    $region33: #{tpu_custom_call.1} parent=1 // pred_fallthru
      _
    // Predicated region
    $region34: #{tpu_custom_call.1} parent=1 // pred_check
      _
    $region35: #{tpu_custom_call.1} parent=1 // pred_check_branch
      %427 = sbr.rel (0) target = $region37
    $region36: #{tpu_custom_call.1} parent=1 // pred_region
      %428 = dma.done [#allocation3], 128
    $region37: #{tpu_custom_call.1} parent=1 // pred_fallthru
      _
    %429 = vsyncpa [#allocation3], 1

</llo_original>
